<compile_context>
chip_gen: v7x
topology: tpu7x:2x2x1
jax: 0.10.0
libtpu: 0.0.40
codegen_flags: <defaults>
</compile_context>

<pallas_src>
import jax
import jax.numpy as jnp
from jax.experimental import pallas as pl
from jax.experimental.pallas import tpu as pltpu

_LANE = 128


def _fast_sobel_kernel(x_ref, o_ref):
    """One grid step: TB independent single-channel images.

    x_ref: (TB, H, W)    input slab (VMEM)
    o_ref: (TB, Ho, Wp)  output slab (VMEM); Wp >= Wo = W-2, wrapper crops.
    """
    H, W = x_ref.shape[1], x_ref.shape[2]
    Ho, Wp = o_ref.shape[1], o_ref.shape[2]

    # Single upcast per slab (v5e has no bf16 VALU path).
    x = x_ref[...].astype(jnp.float32)                      # (TB, H, W)
    # TODO(synk): optional bf16 tap-sum path on v6e/v7x would halve vreg
    # pressure and allow ~2x larger TB; kept f32 for v5e portability.

    # --- Horizontal pass (lane axis): shifted views via XLU rolls ------------
    # roll by (W - k) == jnp.roll(..., -k): column j picks up x[..., j + k].
    # Wrapped tail columns only feed output columns >= Wo, cropped by wrapper.
    x1 = pltpu.roll(x, shift=W - 1, axis=2)                 # x[..., j+1]
    x2 = pltpu.roll(x, shift=W - 2, axis=2)                 # x[..., j+2]
    d = x - x2                                              # taps [1, 0, -1]
    s = x + (x1 + x1) + x2                                  # taps [1, 2, 1]

    # --- Vertical pass (sublane axis): shifted views via XLU rolls -----------
    d1 = pltpu.roll(d, shift=H - 1, axis=1)                 # d[:, i+1, :]
    d2 = pltpu.roll(d, shift=H - 2, axis=1)                 # d[:, i+2, :]
    s2 = pltpu.roll(s, shift=H - 2, axis=1)
    a = d + (d1 + d1) + d2                                  # gx / 2
    b = s - s2                                              # gy / 2

    # Fused square -> channel-sum -> sqrt; the factored-out 2 applied once.
    mag = 2.0 * jnp.sqrt(a * a + b * b)                     # (TB, H, W)

    # Origin-aligned crop (starts at (0,0): no relayout) + store.
    o_ref[...] = mag[:, :Ho, :Wp].astype(o_ref.dtype)


def _vmem_capacity_bytes() -> int:
    try:
        cap = getattr(pltpu.get_tpu_info(), "vmem_capacity_bytes", None)
        if cap:
            return int(cap)
    except Exception:
        pass
    return 64 * 1024 * 1024        # assume the smallest (v7x per-TC) if unknown


def _pick_store_width(w: int, wo: int) -> int:
    """Largest lane-dense (multiple-of-128) store width in [wo, w]; else w.

    Storing a full-width / aligned-prefix slab keeps every row store unmasked;
    the <= 2 extra columns are removed by one cheap XLA slice in the wrapper.
    """
    aligned = (w // _LANE) * _LANE
    return aligned if aligned >= max(wo, _LANE) else w


def _pick_images_per_block(n: int, h: int, w: int, ho: int, wp: int,
                           itemsize: int, budget_bytes: int) -> int:
    """Largest images-per-block whose per-step VMEM footprint fits the budget."""
    per_image = (
        2 * h * w * itemsize        # double-buffered input DMA block
        + 2 * ho * wp * itemsize    # double-buffered output DMA block
        + 6 * h * w * 4             # peak live f32 stencil intermediates
    )
    tb = max(1, budget_bytes // max(per_image, 1))
    if n >= 2:
        # Guarantee >= 2 grid steps: keeps both v7x TensorCores busy and lets
        # the DMAs of step i+1 overlap with compute of step i.
        tb = min(tb, pl.cdiv(n, 2))
    return min(tb, n)


def fast_sobel(x: jax.Array) -> jax.Array:
    """Sobel gradient magnitude (NCHW), matching FastSobel.forward.

    x: (B, 1, H, W).  Returns (B, 1, H-2, W-2) ('valid' 3x3 conv), same dtype.
    """
    B, C, H, W = x.shape
    if C != 1:
        raise ValueError(f"FastSobel expects a single input channel, got C={C}")
    if H < 3 or W < 3:
        raise ValueError("FastSobel needs H >= 3 and W >= 3")

    Ho, Wo = H - 2, W - 2
    Wp = _pick_store_width(W, Wo)
    N = B * C
    x_flat = x.reshape(N, H, W)
    itemsize = jnp.dtype(x.dtype).itemsize

    cap = _vmem_capacity_bytes()
    # Generation-aware per-block budget: ~28 MiB on v5e/v6e (128 MiB VMEM),
    # ~21 MiB on v7x (64 MiB per TC), leaving headroom for compiler scratch.
    budget = min(cap // 3, 28 * 1024 * 1024)
    TB = _pick_images_per_block(N, H, W, Ho, Wp, itemsize, budget)

    per_block = TB * (2 * H * W * itemsize + 2 * Ho * Wp * itemsize + 6 * H * W * 4)
    vmem_limit = int(min(max(per_block + (8 << 20), 32 << 20),
                         max(cap - (8 << 20), 16 << 20)))

    # TODO(synk): for W << 128 (thumbnails) pack several images along the lane
    # axis to fill the 128-lane vregs; as written, tiny widths run at W/128
    # lane utilization.
    # TODO(synk): for single images whose f32 working set exceeds the budget,
    # tile H with a 2-row halo instead of relying on one oversized block.

    out_flat = pl.pallas_call(
        _fast_sobel_kernel,
        out_shape=jax.ShapeDtypeStruct((N, Ho, Wp), x.dtype),
        grid_spec=pltpu.PrefetchScalarGridSpec(
            num_scalar_prefetch=0,
            grid=(pl.cdiv(N, TB),),                 # ragged last block is OK:
            in_specs=[pl.BlockSpec((TB, H, W), lambda i: (i, 0, 0))],
            out_specs=pl.BlockSpec((TB, Ho, Wp), lambda i: (i, 0, 0)),
        ),
        compiler_params=pltpu.CompilerParams(
            dimension_semantics=("parallel",),
            vmem_limit_bytes=vmem_limit,
        ),
    )(x_flat)

    if Wp != Wo:
        out_flat = out_flat[:, :, :Wo]   # one cheap XLA crop; kernel stores stay dense
    return out_flat.reshape(B, C, Ho, Wo)


if __name__ == "__main__":
    key = jax.random.PRNGKey(0)
    B, C, H, W = 2, 1, 16, 16            # FastSobel requires in_channels=1
    x = jax.random.uniform(key, (B, C, H, W), dtype=jnp.float32)

    y = fast_sobel(x)
    y = jax.block_until_ready(y)

    # Pure-JAX reference: explicit 3x3 cross-correlation (PyTorch conv2d
    # semantics), square, channel-sum, sqrt.
    gx_w = jnp.array([[2.0, 0.0, -2.0],
                      [4.0, 0.0, -4.0],
                      [2.0, 0.0, -2.0]], jnp.float32)
    gy_w = jnp.array([[2.0, 4.0, 2.0],
                      [0.0, 0.0, 0.0],
                      [-2.0, -4.0, -2.0]], jnp.float32)
    Ho, Wo = H - 2, W - 2
    xf = x[:, 0].astype(jnp.float32)
    gx = jnp.zeros((B, Ho, Wo), jnp.float32)
    gy = jnp.zeros((B, Ho, Wo), jnp.float32)
    for i in range(3):
        for j in range(3):
            patch = xf[:, i:i + Ho, j:j + Wo]
            gx = gx + gx_w[i, j] * patch
            gy = gy + gy_w[i, j] * patch
    ref = jnp.sqrt(gx * gx + gy * gy)[:, None, :, :].astype(x.dtype)

    assert y.shape == (B, 1, Ho, Wo)
    assert y.dtype == x.dtype
    assert jnp.allclose(y, ref, atol=1e-4, rtol=1e-4)

    print("KERNEL_OK")
</pallas_src>

<mosaic_0001>
module attributes {stable_mosaic.version = 11 : i64} {
  func.func @_fast_sobel_kernel(%arg0: i32, %arg1: memref<1x16x16xf32, #tpu.memory_space<vmem>>, %arg2: memref<1x14x16xf32, #tpu.memory_space<vmem>>) attributes {dimension_semantics = [#tpu.dimension_semantics<parallel>], iteration_bounds = array<i64: 2>, scalar_prefetch = 0 : i64, scratch_operands = 0 : i64, tpu.core_type = #tpu.core_type<tc>, window_params = [{transform_indices = @transform_0, window_bounds = array<i64: 1, 16, 16>}, {transform_indices = @transform_1, window_bounds = array<i64: 1, 14, 16>}]} {
    %c0 = arith.constant 0 : index
    %c0_0 = arith.constant 0 : index
    %c0_1 = arith.constant 0 : index
    %0 = vector.load %arg1[%c0, %c0_0, %c0_1] : memref<1x16x16xf32, #tpu.memory_space<vmem>>, vector<1x16x16xf32>
    %c15_i32 = arith.constant 15 : i32
    %1 = tpu.dynamic_rotate %0 by %c15_i32 dim 2 : vector<1x16x16xf32>, i32 -> vector<1x16x16xf32>
    %c14_i32 = arith.constant 14 : i32
    %2 = tpu.dynamic_rotate %0 by %c14_i32 dim 2 : vector<1x16x16xf32>, i32 -> vector<1x16x16xf32>
    %3 = arith.subf %0, %2 : vector<1x16x16xf32>
    %4 = arith.addf %1, %1 : vector<1x16x16xf32>
    %5 = arith.addf %0, %4 : vector<1x16x16xf32>
    %6 = arith.addf %5, %2 : vector<1x16x16xf32>
    %c15_i32_2 = arith.constant 15 : i32
    %7 = tpu.dynamic_rotate %3 by %c15_i32_2 dim 1 : vector<1x16x16xf32>, i32 -> vector<1x16x16xf32>
    %c14_i32_3 = arith.constant 14 : i32
    %8 = tpu.dynamic_rotate %3 by %c14_i32_3 dim 1 : vector<1x16x16xf32>, i32 -> vector<1x16x16xf32>
    %c14_i32_4 = arith.constant 14 : i32
    %9 = tpu.dynamic_rotate %6 by %c14_i32_4 dim 1 : vector<1x16x16xf32>, i32 -> vector<1x16x16xf32>
    %10 = arith.addf %7, %7 : vector<1x16x16xf32>
    %11 = arith.addf %3, %10 : vector<1x16x16xf32>
    %12 = arith.addf %11, %8 : vector<1x16x16xf32>
    %13 = arith.subf %6, %9 : vector<1x16x16xf32>
    %14 = arith.mulf %12, %12 : vector<1x16x16xf32>
    %15 = arith.mulf %13, %13 : vector<1x16x16xf32>
    %16 = arith.addf %14, %15 : vector<1x16x16xf32>
    %17 = math.sqrt %16 : vector<1x16x16xf32>
    %cst = arith.constant 2.000000e+00 : f32
    %18 = vector.broadcast %cst : f32 to vector<1x16x16xf32>
    %19 = arith.mulf %18, %17 : vector<1x16x16xf32>
    %20 = vector.extract_strided_slice %19 {offsets = [0, 0, 0], sizes = [1, 14, 16], strides = [1, 1, 1]} : vector<1x16x16xf32> to vector<1x14x16xf32>
    %c0_5 = arith.constant 0 : index
    %c0_6 = arith.constant 0 : index
    %c0_7 = arith.constant 0 : index
    %21 = vector.load %arg2[%c0_5, %c0_6, %c0_7] : memref<1x14x16xf32, #tpu.memory_space<vmem>>, vector<1x14x16xf32>
    tpu.vector_store %arg2[%c0_5, %c0_6, %c0_7], %20 {strides = array<i32>} : memref<1x14x16xf32, #tpu.memory_space<vmem>>, vector<1x14x16xf32>,
    return
  }
  func.func @transform_0(%arg0: i32) -> (i32, i32, i32) {
    %c0_i32 = arith.constant 0 : i32
    %c0_i32_0 = arith.constant 0 : i32
    %c0_i32_1 = arith.constant 0 : i32
    return %arg0, %c0_i32, %c0_i32_0 : i32, i32, i32
  }
  func.func @transform_1(%arg0: i32) -> (i32, i32, i32) {
    %c0_i32 = arith.constant 0 : i32
    %c0_i32_0 = arith.constant 0 : i32
    %c0_i32_1 = arith.constant 0 : i32
    return %arg0, %c0_i32, %c0_i32_0 : i32, i32, i32
  }
}

</mosaic_0001>

<llo_original>
// kernel: tpu_custom_call.1
$region0: #{tpu_custom_call.1}
  #allocation0 [shape = 'u32[]', space=smem, size = 0x4, offset = 0x4, fixed_abs, tag = 'smem constant byte address 0x4 - core index']
  #allocation1 [shape = 'u32[144,128]{1,0:T(1,128)}', space=vmem, size = 0x12000, scoped, tag = 'internal scratch']
  %s0 = inlined_call_operand.hbm [shape: f32[2,16,16], index: 0, kind: input, shape index: {}]
  %s1 = inlined_call_operand.vmem [shape: f32[2,14,16], index: 1, kind: output, shape index: {}]
  %s2 = sld [smem:[#allocation0]]
  $region41: #{tpu_custom_call.1} parent=0
    _
  %s4 = ssub.s32 1, %s2
  %s5 = scalar_select 0, %s4, %s2
  $region1: #{tpu_custom_call.1} parent=0
    #allocation2 [shape = 'u8[16384]{0}', space=vmem, size = 0x4000, scoped, tag = 'input window, operand 0']
    #allocation3 [shape = 's32[2]{0}', space=sflag, size = 0x8, scoped, tag = 'scoped memory for tpu_custom_call.1']
    %6 = vsyncpa [#allocation3], 0
    %s7 = scalar_lea.sflag [#allocation3], 1
    %8 = vsyncpa %s7, 0
    loop: start=0, step=1, limit=4
    $region2: #{tpu_custom_call.1} parent=1 // loop_pre_header
      _
    $region3: #{tpu_custom_call.1} parent=1 // loop_header
      %s10 = sphi 0, %s14
      %p11 = scmp.ge.s32.totalorder %s10, 4
      %s20 = sphi 0, %s22
      %s23 = sphi 0, %s20
      %s24 = sphi 0, %s23
      %s40 = sphi 0, %s24
      %s46 = sphi 0, %s48
      %s49 = sphi 0, %s46
      %s50 = sphi 0, %s49
      %s66 = sphi 0, %s50
    $region4: #{tpu_custom_call.1} parent=1 // loop_header_branch
      %13 = sbr.rel (%p11) target = $region8
    $region5: #{tpu_custom_call.1} parent=1 // loop_body
      %s15 = ssub.s32 %s10, 1
      %s16 = ssub.s32 %s10, 2
      %s17 = sadd.s32 %s10, 1
      %s18 = ssub.s32 %s10, %s17
      %p19 = scmp.eq.s32.totalorder %s18, 0
      %s21 = sadd.s32 %s20, 1
      %s22 = scalar_select %p19, %s20, %s21
      %p25 = pneg %p19
      %p26 = scmp.eq.s32.totalorder %s10, 1
      %p27 = por %p25, %p26
      %p28 = scmp.ne.s32.totalorder %s20, %s23
      %p29 = scmp.eq.s32.totalorder %s10, 0
      %p30 = por %p28, %p29
      %p31 = scmp.ne.s32.totalorder %s20, %s23
      %p32 = scmp.eq.s32.totalorder %s15, 1
      %p33 = por %p31, %p32
      %p34 = scmp.ne.s32.totalorder %s23, %s24
      %p35 = scmp.eq.s32.totalorder %s15, 0
      %p36 = por %p34, %p35
      %p37 = scmp.ne.s32.totalorder %s23, %s24
      %p38 = scmp.eq.s32.totalorder %s16, 1
      %p39 = por %p37, %p38
      %p41 = scmp.ne.s32.totalorder %s24, %s40
      %p42 = scmp.eq.s32.totalorder %s16, 0
      %p43 = por %p41, %p42
      %s44 = ssub.s32 %s10, %s17
      %p45 = scmp.eq.s32.totalorder %s44, 0
      %s47 = sadd.s32 %s46, 1
      %s48 = scalar_select %p45, %s46, %s47
      %p51 = pneg %p45
      %p52 = scmp.eq.s32.totalorder %s10, 1
      %p53 = por %p51, %p52
      %p54 = scmp.ne.s32.totalorder %s46, %s49
      %p55 = scmp.eq.s32.totalorder %s10, 0
      %p56 = por %p54, %p55
      %p57 = scmp.ne.s32.totalorder %s46, %s49
      %p58 = scmp.eq.s32.totalorder %s15, 1
      %p59 = por %p57, %p58
      %p60 = scmp.ne.s32.totalorder %s49, %s50
      %p61 = scmp.eq.s32.totalorder %s15, 0
      %p62 = por %p60, %p61
      %p63 = scmp.ne.s32.totalorder %s49, %s50
      %p64 = scmp.eq.s32.totalorder %s16, 1
      %p65 = por %p63, %p64
      %p67 = scmp.ne.s32.totalorder %s50, %s66
      %p68 = scmp.eq.s32.totalorder %s16, 0
      %p69 = por %p67, %p68
      %p70 = scmp.le.s32.totalorder 1, %s10
      %p71 = scmp.lt.s32.totalorder %s10, 3
      %p72 = pnand %p70, %p71
      %p73 = pneg %p72
      // Predicated region
      $region9: #{tpu_custom_call.1} parent=5 // pred_check
        _
      $region10: #{tpu_custom_call.1} parent=5 // pred_check_branch
        %75 = sbr.rel (%p72) target = $region12
      $region11: #{tpu_custom_call.1} parent=5 // pred_region
        %s76 = ssub.s32 %s10, 1
      $region12: #{tpu_custom_call.1} parent=5 // pred_fallthru
        _
      %p77 = scmp.lt.s32.totalorder %s10, 2
      // Predicated region
      $region13: #{tpu_custom_call.1} parent=5 // pred_check
        %p78 = pneg %p77
      $region14: #{tpu_custom_call.1} parent=5 // pred_check_branch
        %80 = sbr.rel (%p78) target = $region16
      $region15: #{tpu_custom_call.1} parent=5 // pred_region
        // Predicated region
        $region17: #{tpu_custom_call.1} parent=15 // pred_check
          %p81 = pneg %p30
        $region18: #{tpu_custom_call.1} parent=15 // pred_check_branch
          %83 = sbr.rel (%p81) target = $region20
        $region19: #{tpu_custom_call.1} parent=15 // pred_region
          %s84 = sand.u32 %s20, 1
          %s85 = scalar_lea.sflag [#allocation3], %s84
          %s86 = sand.u32 %s20, 1
          %s87 = smul.addr %s86, 16
          %s88 = scalar_lea.vmem [#allocation2], %s87
          %s90 = ssub.s32 256, 256
          %91 = vsyncadd %s85, %s90
          %s92 = smul.addr %s10, 2
          %s93 = smul.addr %s92, 128
          %s94 = scalar_lea.hbm %s0, %s93
          %s95 = sshll.u32 %s88, 4
          %s96 = int_to_ptr.vmem [resolvable:$true] %s95
          %101 = dma.hbm_to_vmem [thread:$0]  %s94, 256, %s96, %s85, 128, 128, 8
        $region20: #{tpu_custom_call.1} parent=15 // pred_fallthru
          _
      $region16: #{tpu_custom_call.1} parent=5 // pred_fallthru
        _
      %p102 = scmp.le.s32.totalorder 1, %s10
      %p103 = scmp.lt.s32.totalorder %s10, 3
      %p104 = pnand %p102, %p103
      %p105 = pneg %p104
      // Predicated region
      $region21: #{tpu_custom_call.1} parent=5 // pred_check
        _
      $region22: #{tpu_custom_call.1} parent=5 // pred_check_branch
        %107 = sbr.rel (%p104) target = $region24
      $region23: #{tpu_custom_call.1} parent=5 // pred_region
        %s108 = ssub.s32 %s10, 1
        %s109 = sand.u32 %s23, 1
        %s110 = scalar_lea.sflag [#allocation3], %s109
        %s111 = sand.u32 %s23, 1
        %s112 = smul.addr %s111, 16
        %s113 = scalar_lea.vmem [#allocation2], %s112
        // Predicated region
        $region25: #{tpu_custom_call.1} parent=23 // pred_check
          %p114 = pneg %p36
        $region26: #{tpu_custom_call.1} parent=23 // pred_check_branch
          %116 = sbr.rel (%p114) target = $region28
        $region27: #{tpu_custom_call.1} parent=23 // pred_region
          %117 = dma.done %s110, 256
        $region28: #{tpu_custom_call.1} parent=23 // pred_fallthru
          _
        %s118 = sand.u32 %s23, 1
        %s119 = scalar_lea.sflag [#allocation3], %s118
        %s120 = sand.u32 %s23, 1
        %s121 = smul.addr %s120, 16
        %s122 = scalar_lea.vmem [#allocation2], %s121
        %p123 = pneg %p36
        %p124 = pneg %p33
        %p125 = pneg %p62
        %p126 = pneg %p59
        %p127 = scmp.lt.s32.totalorder %s15, 1
        %s128 = scalar_select %p127, %s15, 1
        %s129 = smul.addr %s128, 2
        %s130 = smul.addr %s129, 8
        %s131 = scalar_lea.vmem %s1, %s130
        %p132 = scmp.lt.s32.totalorder %s15, 1
        %s133 = scalar_select %p132, %s15, 1
        %s134 = smul.addr %s133, 2
        %s135 = smul.addr %s134, 8
        %s136 = scalar_lea.vmem %s1, %s135
        %v137 = vld [vmem:[%s113] sm:$0xff]
        %v138 = vld [vmem:[%s113 + $0x8] sm:$0xff]
        %vm139 = vcmask 1047680
        %140 = vrot.lane.b32.xlu0 %v137, 16
        %v141 = vpop.permute.xlu0 %140
        %v142 = vsel %vm139, %v141, %v137
        %143 = vrot.lane.b32.xlu0 %v138, 16
        %v144 = vpop.permute.xlu0 %143
        %v145 = vsel %vm139, %v144, %v138
        %146 = vrot.lane.b32.xlu0 %v142, 16
        %v147 = vpop.permute.xlu0 %146
        %148 = vrot.lane.b32.xlu0 %v145, 16
        %v149 = vpop.permute.xlu0 %148
        %v150 = vsel %vm139, %v147, %v137
        %v151 = vsel %vm139, %v149, %v138
        %154 = vrot.lane.b32.xlu0 %v150, 126
        %v155 = vpop.permute.xlu0 %154
        %156 = vrot.lane.b32.xlu0 %v151, 126
        %v157 = vpop.permute.xlu0 %156
        %v160 = vsub.f32 %v137, %v155
        %v161 = vsub.f32 %v138, %v157
        %v162 = vadd.f32 %v150, %v150
        %v163 = vadd.f32 %v151, %v151
        %166 = vrot.lane.b32.xlu0 %v162, 127
        %v167 = vpop.permute.xlu0 %166
        %168 = vrot.lane.b32.xlu0 %v163, 127
        %v169 = vpop.permute.xlu0 %168
        %v172 = vadd.f32 %v137, %v167
        %v173 = vadd.f32 %v138, %v169
        %v174 = vadd.f32 %v172, %v155
        %v175 = vadd.f32 %v173, %v157
        %v176 = vrot.slane %v160, 1
        %v177 = vrot.slane %v161, 1
        %v178 = vlaneseq
        %v179 = vshrl.u32 %v178, 7
        %vm180 = vcmp.lt.s32.totalorder %v179, 7
        %v181 = vsel %vm180, %v176, %v177
        %v182 = vsel %vm180, %v177, %v176
        %v183 = vrot.slane %v160, 2
        %v184 = vrot.slane %v161, 2
        %vm185 = vcmp.lt.s32.totalorder %v179, 6
        %v186 = vsel %vm185, %v183, %v184
        %v187 = vsel %vm185, %v184, %v183
        %v188 = vrot.slane %v174, 2
        %v189 = vrot.slane %v175, 2
        %v190 = vsel %vm185, %v188, %v189
        %v191 = vsel %vm185, %v189, %v188
        %v192 = vadd.f32 %v181, %v181
        %v193 = vadd.f32 %v182, %v182
        %v194 = vadd.f32 %v160, %v192
        %v195 = vadd.f32 %v161, %v193
        %v196 = vadd.f32 %v194, %v186
        %v197 = vadd.f32 %v195, %v187
        %v198 = vsub.f32 %v174, %v190
        %v199 = vsub.f32 %v175, %v191
        %v200 = vmul.f32 %v196, %v196
        %v201 = vmul.f32 %v197, %v197
        %v202 = vmul.f32 %v198, %v198
        %v203 = vmul.f32 %v199, %v199
        %v204 = vadd.f32 %v200, %v202
        %v205 = vadd.f32 %v201, %v203
        %v206 = vrsqrt.pop %v204
        %v207 = vmul.f32 %v204, %v206
        %vm208 = vcmp.eq.f32.partialorder %v204, inf
        %v209 = vsel %vm208, %v204, %v207
        %vm210 = vcmp.eq.f32.partialorder %v204, 0.0
        %v211 = vand.u32 %v204, 2147483648
        %v212 = vsel %vm210, %v211, %v209
        %v213 = vrsqrt.pop %v205
        %v214 = vmul.f32 %v205, %v213
        %vm215 = vcmp.eq.f32.partialorder %v205, inf
        %v216 = vsel %vm215, %v205, %v214
        %vm217 = vcmp.eq.f32.partialorder %v205, 0.0
        %v218 = vand.u32 %v205, 2147483648
        %v219 = vsel %vm217, %v218, %v216
        %v220 = vmul.f32 %v212, 2.0
        %v221 = vmul.f32 %v219, 2.0
        %vm222 = vcmask 130048
        %223 = vst.msk [vmem:[%s136] sm:$0xff] %vm222, %v220
        %vm224 = vcmask 128000
        %225 = vst.msk [vmem:[%s136 + $0x8] sm:$0x3f] %vm224, %v221
        %p226 = scmp.lt.s32.totalorder %s15, 1
        %s227 = scalar_select %p226, %s15, 1
        %s228 = smul.addr %s227, 2
        %s229 = smul.addr %s228, 8
        %s230 = scalar_lea.vmem %s1, %s229
        // Predicated region
        $region29: #{tpu_custom_call.1} parent=23 // pred_check
          %p231 = pneg %p59
        $region30: #{tpu_custom_call.1} parent=23 // pred_check_branch
          %233 = sbr.rel (%p231) target = $region32
        $region31: #{tpu_custom_call.1} parent=23 // pred_region
          _
        $region32: #{tpu_custom_call.1} parent=23 // pred_fallthru
          _
      $region24: #{tpu_custom_call.1} parent=5 // pred_fallthru
        _
      %p234 = scmp.le.s32.totalorder 2, %s10
      // Predicated region
      $region33: #{tpu_custom_call.1} parent=5 // pred_check
        %p235 = pneg %p234
      $region34: #{tpu_custom_call.1} parent=5 // pred_check_branch
        %237 = sbr.rel (%p235) target = $region36
      $region35: #{tpu_custom_call.1} parent=5 // pred_region
        %s238 = ssub.s32 %s10, 2
        // Predicated region
        $region37: #{tpu_custom_call.1} parent=35 // pred_check
          %p239 = pneg %p65
        $region38: #{tpu_custom_call.1} parent=35 // pred_check_branch
          %241 = sbr.rel (%p239) target = $region40
        $region39: #{tpu_custom_call.1} parent=35 // pred_region
          %p242 = scmp.lt.s32.totalorder %s16, 1
          %s243 = scalar_select %p242, %s16, 1
          %s244 = smul.addr %s243, 2
          %s245 = smul.addr %s244, 8
          %s246 = scalar_lea.vmem %s1, %s245
        $region40: #{tpu_custom_call.1} parent=35 // pred_fallthru
          _
      $region36: #{tpu_custom_call.1} parent=5 // pred_fallthru
        _
    $region6: #{tpu_custom_call.1} parent=1 // loop_footer
      %s14 = sadd.s32 1, %s10
    $region7: #{tpu_custom_call.1} parent=1 // loop_footer_branch
      %9 = sbr.rel target = $region3
    $region8: #{tpu_custom_call.1} parent=1 // loop_exit
      _
    %247 = vsyncpa [#allocation3], 1
    %s248 = scalar_lea.sflag [#allocation3], 1
    %249 = vsyncpa %s248, 1

</llo_original>
